<compile_context>
chip_gen: v7x
topology: tpu7x:2x2x1
jax: 0.10.0
libtpu: 0.0.40
codegen_flags: <defaults>
</compile_context>

<pallas_src>
import functools

import jax
import jax.numpy as jnp
from jax.experimental import pallas as pl
from jax.experimental.pallas import tpu as pltpu

NUM_FEATURES = 784
NUM_CLASSES = 10
CLASS_PAD = 128          # lane-dense class dimension (one full vreg lane width)
DEFAULT_BLOCK_M = 512    # ~1.6 MiB per f32 x tile -> double-buffers easily on v5e/v6e/v7x


def softmax_regression_kernel(x_ref, w_ref, b_ref, logits_ref, probas_ref):
    x = x_ref[...]            # [TM, F]   float32
    w = w_ref[...]            # [F, Cp]   float32 (pre-transposed, class-padded)
    b = b_ref[...]            # [1, Cp]   float32 (padded entries = -1e30)

    # logits = x @ W_fc + b  -- MXU matmul, f32 accumulate, no in-kernel transpose.
    logits = jnp.dot(x, w, preferred_element_type=jnp.float32) + b

    # Numerically-stable softmax over the class dim. Padded classes carry a
    # -1e30 bias, so exp(pad - m) underflows to 0 and never pollutes the denom.
    m = jnp.max(logits, axis=1, keepdims=True)
    e = jnp.exp(logits - m)
    denom = jnp.sum(e, axis=1, keepdims=True)
    probas = e * pl.reciprocal(denom, approx=True)

    logits_ref[...] = logits.astype(logits_ref.dtype)
    probas_ref[...] = probas.astype(probas_ref.dtype)


@functools.partial(jax.jit, static_argnames=("block_m",))
def softmax_regression_forward(x, weight, bias, *, block_m=DEFAULT_BLOCK_M):
    """x: [B, F]; weight: [C, F]; bias: [C]. Returns (logits, probas), each [B, C]."""
    B, F = x.shape
    C = weight.shape[0]
    Cp = CLASS_PAD

    # One-time host-side prep (outside the kernel):
    #  - transpose weight to [F, Cp] so the kernel's matmul is layout-natural,
    #  - zero-pad extra class columns; bias padding must be very negative so
    #    softmax of padded classes is exactly ~0.
    w_fc = jnp.zeros((F, Cp), dtype=jnp.float32).at[:, :C].set(weight.T.astype(jnp.float32))
    b_pad = jnp.full((1, Cp), -1e30, dtype=jnp.float32).at[0, :C].set(bias.astype(jnp.float32))

    tm = min(block_m, B)
    grid = (pl.cdiv(B, tm),)

    logits_p, probas_p = pl.pallas_call(
        softmax_regression_kernel,
        out_shape=(
            jax.ShapeDtypeStruct((B, Cp), jnp.float32),
            jax.ShapeDtypeStruct((B, Cp), jnp.float32),
        ),
        grid=grid,
        in_specs=[
            pl.BlockSpec((tm, F), lambda i: (i, 0)),    # x: streamed per batch tile
            pl.BlockSpec((F, Cp), lambda i: (0, 0)),    # weight: resident across steps
            pl.BlockSpec((1, Cp), lambda i: (0, 0)),    # bias: resident across steps
        ],
        out_specs=(
            pl.BlockSpec((tm, Cp), lambda i: (i, 0)),
            pl.BlockSpec((tm, Cp), lambda i: (i, 0)),
        ),
        compiler_params=pltpu.CompilerParams(
            dimension_semantics=("parallel",),          # shard batch tiles across TCs (v7x)
        ),
    )(x.astype(jnp.float32), w_fc, b_pad)

    # Drop the padded class columns.
    return logits_p[:, :C], probas_p[:, :C]


if __name__ == "__main__":
    key = jax.random.PRNGKey(0)
    batch = 8

    # Deterministic example input (flattened 28x28 MNIST-like images).
    x = jax.random.normal(key, (batch, NUM_FEATURES), dtype=jnp.float32)

    # The PyTorch module explicitly zero-initializes weight and bias.
    weight = jnp.zeros((NUM_CLASSES, NUM_FEATURES), dtype=jnp.float32)
    bias = jnp.zeros((NUM_CLASSES,), dtype=jnp.float32)

    logits, probas = softmax_regression_forward(x, weight, bias)
    jax.block_until_ready((logits, probas))

    # Sanity checks against exact semantics (zero params -> logits=0, probas=1/C).
    assert logits.shape == (batch, NUM_CLASSES)
    assert probas.shape == (batch, NUM_CLASSES)
    assert jnp.allclose(logits, 0.0)
    assert jnp.allclose(probas, 1.0 / NUM_CLASSES, atol=1e-3)      # approx reciprocal
    assert jnp.allclose(jnp.sum(probas, axis=1), 1.0, atol=1e-3)

    print("KERNEL_OK")
</pallas_src>

<mosaic_0001>
module attributes {stable_mosaic.version = 11 : i64} {
  func.func @softmax_regression_kernel(%arg0: i32, %arg1: memref<8x784xf32, #tpu.memory_space<vmem>>, %arg2: memref<784x128xf32, #tpu.memory_space<vmem>>, %arg3: memref<1x128xf32, #tpu.memory_space<vmem>>, %arg4: memref<8x128xf32, #tpu.memory_space<vmem>>, %arg5: memref<8x128xf32, #tpu.memory_space<vmem>>) attributes {dimension_semantics = [#tpu.dimension_semantics<parallel>], iteration_bounds = array<i64: 1>, scalar_prefetch = 0 : i64, scratch_operands = 0 : i64, tpu.core_type = #tpu.core_type<tc>, window_params = [{transform_indices = @transform_0, window_bounds = array<i64: 8, 784>}, {pipeline_mode = #tpu.pipeline_mode<synchronous>, transform_indices = @transform_1, window_bounds = array<i64: 784, 128>}, {pipeline_mode = #tpu.pipeline_mode<synchronous>, transform_indices = @transform_2, window_bounds = array<i64: 1, 128>}, {transform_indices = @transform_3, window_bounds = array<i64: 8, 128>}, {transform_indices = @transform_4, window_bounds = array<i64: 8, 128>}]} {
    %c0 = arith.constant 0 : index
    %c0_0 = arith.constant 0 : index
    %0 = vector.load %arg1[%c0, %c0_0] : memref<8x784xf32, #tpu.memory_space<vmem>>, vector<8x784xf32>
    %c0_1 = arith.constant 0 : index
    %c0_2 = arith.constant 0 : index
    %1 = vector.load %arg2[%c0_1, %c0_2] : memref<784x128xf32, #tpu.memory_space<vmem>>, vector<784x128xf32>
    %c0_3 = arith.constant 0 : index
    %c0_4 = arith.constant 0 : index
    %2 = vector.load %arg3[%c0_3, %c0_4] : memref<1x128xf32, #tpu.memory_space<vmem>>, vector<1x128xf32>
    %cst = arith.constant dense<0.000000e+00> : vector<8x128xf32>
    %3 = tpu.matmul %0, %1, %cst {dimension_numbers = #tpu.dot_dimension_numbers<[1], [0], [0], [1], [0, 0, 1, 1], [], []>} : vector<8x784xf32>, vector<784x128xf32>, vector<8x128xf32> -> vector<8x128xf32>
    %4 = vector.broadcast %2 : vector<1x128xf32> to vector<8x128xf32>
    %5 = arith.addf %3, %4 : vector<8x128xf32>
    %cst_5 = arith.constant dense<0xFF800000> : vector<8xf32>
    %6 = vector.multi_reduction <maximumf>, %5, %cst_5 [1] : vector<8x128xf32> to vector<8xf32>
    %7 = vector.shape_cast %6 : vector<8xf32> to vector<8x1xf32>
    %8 = vector.broadcast %7 : vector<8x1xf32> to vector<8x128xf32>
    %9 = arith.subf %5, %8 : vector<8x128xf32>
    %10 = math.exp %9 : vector<8x128xf32>
    %cst_6 = arith.constant dense<0.000000e+00> : vector<8xf32>
    %11 = vector.multi_reduction <add>, %10, %cst_6 [1] : vector<8x128xf32> to vector<8xf32>
    %12 = vector.shape_cast %11 : vector<8xf32> to vector<8x1xf32>
    %13 = tpu.reciprocal %12 {approx = true} : vector<8x1xf32> -> vector<8x1xf32>
    %14 = vector.broadcast %13 : vector<8x1xf32> to vector<8x128xf32>
    %15 = arith.mulf %10, %14 : vector<8x128xf32>
    %c0_7 = arith.constant 0 : index
    %c0_8 = arith.constant 0 : index
    %16 = vector.load %arg4[%c0_7, %c0_8] : memref<8x128xf32, #tpu.memory_space<vmem>>, vector<8x128xf32>
    tpu.vector_store %arg4[%c0_7, %c0_8], %5 {strides = array<i32>} : memref<8x128xf32, #tpu.memory_space<vmem>>, vector<8x128xf32>,
    %c0_9 = arith.constant 0 : index
    %c0_10 = arith.constant 0 : index
    %17 = vector.load %arg5[%c0_9, %c0_10] : memref<8x128xf32, #tpu.memory_space<vmem>>, vector<8x128xf32>
    tpu.vector_store %arg5[%c0_9, %c0_10], %15 {strides = array<i32>} : memref<8x128xf32, #tpu.memory_space<vmem>>, vector<8x128xf32>,
    return
  }
  func.func @transform_0(%arg0: i32) -> (i32, i32) {
    %c0_i32 = arith.constant 0 : i32
    %c0_i32_0 = arith.constant 0 : i32
    return %arg0, %c0_i32 : i32, i32
  }
  func.func @transform_1(%arg0: i32) -> (i32, i32) {
    %c0_i32 = arith.constant 0 : i32
    %c0_i32_0 = arith.constant 0 : i32
    %c0_i32_1 = arith.constant 0 : i32
    return %c0_i32, %c0_i32_0 : i32, i32
  }
  func.func @transform_2(%arg0: i32) -> (i32, i32) {
    %c0_i32 = arith.constant 0 : i32
    %c0_i32_0 = arith.constant 0 : i32
    %c0_i32_1 = arith.constant 0 : i32
    return %c0_i32, %c0_i32_0 : i32, i32
  }
  func.func @transform_3(%arg0: i32) -> (i32, i32) {
    %c0_i32 = arith.constant 0 : i32
    %c0_i32_0 = arith.constant 0 : i32
    return %arg0, %c0_i32 : i32, i32
  }
  func.func @transform_4(%arg0: i32) -> (i32, i32) {
    %c0_i32 = arith.constant 0 : i32
    %c0_i32_0 = arith.constant 0 : i32
    return %arg0, %c0_i32 : i32, i32
  }
}

</mosaic_0001>

<llo_original>
// kernel: softmax_regression_forward.1
$region0: #{softmax_regression_forward.1}
  #allocation0 [shape = 'u32[]', space=smem, size = 0x4, offset = 0x4, fixed_abs, tag = 'smem constant byte address 0x4 - core index']
  #allocation1 [shape = 'u32[144,128]{1,0:T(1,128)}', space=vmem, size = 0x12000, scoped, tag = 'internal scratch']
  %s0 = inlined_call_operand.vmem [shape: f32[8,784], index: 0, kind: input, shape index: {}]
  %s1 = inlined_call_operand.vmem [shape: f32[784,128], index: 1, kind: input, shape index: {}]
  %s2 = inlined_call_operand.vmem [shape: f32[1,128], index: 2, kind: input, shape index: {}]
  %s3 = inlined_call_operand.hbm [shape: f32[8,128], index: 3, kind: output, shape index: {0}]
  %s4 = inlined_call_operand.hbm [shape: f32[8,128], index: 4, kind: output, shape index: {1}]
  %5 = xla_tuple %s3, %s4
  %s6 = sld [smem:[#allocation0]]
  $region30: #{softmax_regression_forward.1} parent=0
    _
  %s8 = ssub.s32 1, %s6
  %s9 = scalar_select 0, %s8, %s6
  $region1: #{softmax_regression_forward.1} parent=0
    #allocation2 [shape = 'u8[4096]{0}', space=vmem, size = 0x1000, scoped, tag = 'output window, operand 0, single buffered']
    #allocation3 [shape = 's32[1]{0}', space=sflag, size = 0x4, scoped, tag = 'scoped memory for softmax_regression_forward.1']
    #allocation4 [shape = 'u8[4096]{0}', space=vmem, size = 0x1000, scoped, tag = 'output window, operand 1, single buffered']
    #allocation5 [shape = 's32[1]{0}', space=sflag, size = 0x4, scoped, tag = 'scoped memory for softmax_regression_forward.1']
    %10 = vsyncpa [#allocation3], 0
    %11 = vsyncpa [#allocation5], 0
    // Predicated region
    $region2: #{softmax_regression_forward.1} parent=1 // pred_check
      _
    $region3: #{softmax_regression_forward.1} parent=1 // pred_check_branch
      %13 = sbr.rel (0) target = $region5
    $region4: #{softmax_regression_forward.1} parent=1 // pred_region
      _
    $region5: #{softmax_regression_forward.1} parent=1 // pred_fallthru
      _
    // Predicated region
    $region6: #{softmax_regression_forward.1} parent=1 // pred_check
      _
    $region7: #{softmax_regression_forward.1} parent=1 // pred_check_branch
      %15 = sbr.rel (0) target = $region9
    $region8: #{softmax_regression_forward.1} parent=1 // pred_region
      _
    $region9: #{softmax_regression_forward.1} parent=1 // pred_fallthru
      _
    // Predicated region
    $region10: #{softmax_regression_forward.1} parent=1 // pred_check
      _
    $region11: #{softmax_regression_forward.1} parent=1 // pred_check_branch
      %17 = sbr.rel (0) target = $region13
    $region12: #{softmax_regression_forward.1} parent=1 // pred_region
      _
    $region13: #{softmax_regression_forward.1} parent=1 // pred_fallthru
      _
    %v18 = vld [vmem:[%s0] sm:$0xff]
    %v19 = vld [vmem:[%s0 + $0x8] sm:$0xff]
    %v20 = vld [vmem:[%s0 + $0x10] sm:$0xff]
    %v21 = vld [vmem:[%s0 + $0x18] sm:$0xff]
    %v22 = vld [vmem:[%s0 + $0x20] sm:$0xff]
    %v23 = vld [vmem:[%s0 + $0x28] sm:$0xff]
    %v24 = vld [vmem:[%s0 + $0x30] sm:$0xff]
    %v25 = vld [vmem:[%s1] sm:$0xff]
    %v26 = vld [vmem:[%s1 + $0x8] sm:$0xff]
    %v27 = vld [vmem:[%s1 + $0x10] sm:$0xff]
    %v28 = vld [vmem:[%s1 + $0x18] sm:$0xff]
    %v29 = vld [vmem:[%s1 + $0x20] sm:$0xff]
    %v30 = vld [vmem:[%s1 + $0x28] sm:$0xff]
    %v31 = vld [vmem:[%s1 + $0x30] sm:$0xff]
    %v32 = vld [vmem:[%s1 + $0x38] sm:$0xff]
    %v33 = vld [vmem:[%s1 + $0x40] sm:$0xff]
    %v34 = vld [vmem:[%s1 + $0x48] sm:$0xff]
    %v35 = vld [vmem:[%s1 + $0x50] sm:$0xff]
    %v36 = vld [vmem:[%s1 + $0x58] sm:$0xff]
    %v37 = vld [vmem:[%s1 + $0x60] sm:$0xff]
    %v38 = vld [vmem:[%s1 + $0x68] sm:$0xff]
    %v39 = vld [vmem:[%s1 + $0x70] sm:$0xff]
    %v40 = vld [vmem:[%s1 + $0x78] sm:$0xff]
    %v41 = vld [vmem:[%s1 + $0x80] sm:$0xff]
    %v42 = vld [vmem:[%s1 + $0x88] sm:$0xff]
    %v43 = vld [vmem:[%s1 + $0x90] sm:$0xff]
    %v44 = vld [vmem:[%s1 + $0x98] sm:$0xff]
    %v45 = vld [vmem:[%s1 + $0xa0] sm:$0xff]
    %v46 = vld [vmem:[%s1 + $0xa8] sm:$0xff]
    %v47 = vld [vmem:[%s1 + $0xb0] sm:$0xff]
    %v48 = vld [vmem:[%s1 + $0xb8] sm:$0xff]
    %v49 = vld [vmem:[%s1 + $0xc0] sm:$0xff]
    %v50 = vld [vmem:[%s1 + $0xc8] sm:$0xff]
    %v51 = vld [vmem:[%s1 + $0xd0] sm:$0xff]
    %v52 = vld [vmem:[%s1 + $0xd8] sm:$0xff]
    %v53 = vld [vmem:[%s1 + $0xe0] sm:$0xff]
    %v54 = vld [vmem:[%s1 + $0xe8] sm:$0xff]
    %v55 = vld [vmem:[%s1 + $0xf0] sm:$0xff]
    %v56 = vld [vmem:[%s1 + $0xf8] sm:$0xff]
    %v57 = vld [vmem:[%s1 + $0x100] sm:$0xff]
    %v58 = vld [vmem:[%s1 + $0x108] sm:$0xff]
    %v59 = vld [vmem:[%s1 + $0x110] sm:$0xff]
    %v60 = vld [vmem:[%s1 + $0x118] sm:$0xff]
    %v61 = vld [vmem:[%s1 + $0x120] sm:$0xff]
    %v62 = vld [vmem:[%s1 + $0x128] sm:$0xff]
    %v63 = vld [vmem:[%s1 + $0x130] sm:$0xff]
    %v64 = vld [vmem:[%s1 + $0x138] sm:$0xff]
    %v65 = vld [vmem:[%s1 + $0x140] sm:$0xff]
    %v66 = vld [vmem:[%s1 + $0x148] sm:$0xff]
    %v67 = vld [vmem:[%s1 + $0x150] sm:$0xff]
    %v68 = vld [vmem:[%s1 + $0x158] sm:$0xff]
    %v69 = vld [vmem:[%s1 + $0x160] sm:$0xff]
    %v70 = vld [vmem:[%s1 + $0x168] sm:$0xff]
    %v71 = vld [vmem:[%s1 + $0x170] sm:$0xff]
    %v72 = vld [vmem:[%s1 + $0x178] sm:$0xff]
    %v73 = vld [vmem:[%s1 + $0x180] sm:$0xff]
    %v74 = vld [vmem:[%s1 + $0x188] sm:$0xff]
    %v75 = vld [vmem:[%s1 + $0x190] sm:$0xff]
    %v76 = vld [vmem:[%s1 + $0x198] sm:$0xff]
    %v77 = vld [vmem:[%s1 + $0x1a0] sm:$0xff]
    %v78 = vld [vmem:[%s1 + $0x1a8] sm:$0xff]
    %v79 = vld [vmem:[%s1 + $0x1b0] sm:$0xff]
    %v80 = vld [vmem:[%s1 + $0x1b8] sm:$0xff]
    %v81 = vld [vmem:[%s1 + $0x1c0] sm:$0xff]
    %v82 = vld [vmem:[%s1 + $0x1c8] sm:$0xff]
    %v83 = vld [vmem:[%s1 + $0x1d0] sm:$0xff]
    %v84 = vld [vmem:[%s1 + $0x1d8] sm:$0xff]
    %v85 = vld [vmem:[%s1 + $0x1e0] sm:$0xff]
    %v86 = vld [vmem:[%s1 + $0x1e8] sm:$0xff]
    %v87 = vld [vmem:[%s1 + $0x1f0] sm:$0xff]
    %v88 = vld [vmem:[%s1 + $0x1f8] sm:$0xff]
    %v89 = vld [vmem:[%s1 + $0x200] sm:$0xff]
    %v90 = vld [vmem:[%s1 + $0x208] sm:$0xff]
    %v91 = vld [vmem:[%s1 + $0x210] sm:$0xff]
    %v92 = vld [vmem:[%s1 + $0x218] sm:$0xff]
    %v93 = vld [vmem:[%s1 + $0x220] sm:$0xff]
    %v94 = vld [vmem:[%s1 + $0x228] sm:$0xff]
    %v95 = vld [vmem:[%s1 + $0x230] sm:$0xff]
    %v96 = vld [vmem:[%s1 + $0x238] sm:$0xff]
    %v97 = vld [vmem:[%s1 + $0x240] sm:$0xff]
    %v98 = vld [vmem:[%s1 + $0x248] sm:$0xff]
    %v99 = vld [vmem:[%s1 + $0x250] sm:$0xff]
    %v100 = vld [vmem:[%s1 + $0x258] sm:$0xff]
    %v101 = vld [vmem:[%s1 + $0x260] sm:$0xff]
    %v102 = vld [vmem:[%s1 + $0x268] sm:$0xff]
    %v103 = vld [vmem:[%s1 + $0x270] sm:$0xff]
    %v104 = vld [vmem:[%s1 + $0x278] sm:$0xff]
    %v105 = vld [vmem:[%s1 + $0x280] sm:$0xff]
    %v106 = vld [vmem:[%s1 + $0x288] sm:$0xff]
    %v107 = vld [vmem:[%s1 + $0x290] sm:$0xff]
    %v108 = vld [vmem:[%s1 + $0x298] sm:$0xff]
    %v109 = vld [vmem:[%s1 + $0x2a0] sm:$0xff]
    %v110 = vld [vmem:[%s1 + $0x2a8] sm:$0xff]
    %v111 = vld [vmem:[%s1 + $0x2b0] sm:$0xff]
    %v112 = vld [vmem:[%s1 + $0x2b8] sm:$0xff]
    %v113 = vld [vmem:[%s1 + $0x2c0] sm:$0xff]
    %v114 = vld [vmem:[%s1 + $0x2c8] sm:$0xff]
    %v115 = vld [vmem:[%s1 + $0x2d0] sm:$0xff]
    %v116 = vld [vmem:[%s1 + $0x2d8] sm:$0xff]
    %v117 = vld [vmem:[%s1 + $0x2e0] sm:$0xff]
    %v118 = vld [vmem:[%s1 + $0x2e8] sm:$0xff]
    %v119 = vld [vmem:[%s1 + $0x2f0] sm:$0xff]
    %v120 = vld [vmem:[%s1 + $0x2f8] sm:$0xff]
    %v121 = vld [vmem:[%s1 + $0x300] sm:$0xff]
    %v122 = vld [vmem:[%s1 + $0x308] sm:$0xff]
    %v123 = vld [vmem:[%s2] sm:$0x1]
    %v125 = vlaneseq
    %v126 = vshrl.u32 %v125, 7
    %v127 = vsub.s32 0, %v126
    %v128 = vrot.slane %v123, %v127
    %vm130 = vcmask 130048
    %v132 = vsel %vm130, %v24, 0
    %134 = vmatprep.subr.mxu0 0.0
    %135 = vmatpush1.msra.mxu0 %v25
    %136 = vmatprep.subr.mxu0 0.0
    %137 = vmatpush1.msra.mxu0 %v26
    %138 = vmatprep.subr.mxu0 0.0
    %139 = vmatpush1.msra.mxu0 %v27
    %140 = vmatprep.subr.mxu0 0.0
    %141 = vmatpush1.msra.mxu0 %v28
    %142 = vmatprep.subr.mxu0 0.0
    %143 = vmatpush1.msra.mxu0 %v29
    %144 = vmatprep.subr.mxu0 0.0
    %145 = vmatpush1.msra.mxu0 %v30
    %146 = vmatprep.subr.mxu0 0.0
    %147 = vmatpush1.msra.mxu0 %v31
    %148 = vmatprep.subr.mxu0 0.0
    %149 = vmatpush1.msra.mxu0 %v32
    %150 = vmatprep.subr.mxu0 0.0
    %151 = vmatpush1.msra.mxu0 %v33
    %152 = vmatprep.subr.mxu0 0.0
    %153 = vmatpush1.msra.mxu0 %v34
    %154 = vmatprep.subr.mxu0 0.0
    %155 = vmatpush1.msra.mxu0 %v35
    %156 = vmatprep.subr.mxu0 0.0
    %157 = vmatpush1.msra.mxu0 %v36
    %158 = vmatprep.subr.mxu0 0.0
    %159 = vmatpush1.msra.mxu0 %v37
    %160 = vmatprep.subr.mxu0 0.0
    %161 = vmatpush1.msra.mxu0 %v38
    %162 = vmatprep.subr.mxu0 0.0
    %163 = vmatpush1.msra.mxu0 %v39
    %164 = vmatprep.subr.mxu0 0.0
    %165 = vmatpush1.msra.mxu0 %v40
    %166 = vmatprep.subr.mxu0 0.0
    %167 = vmatpush1.msra.mxu0 %v41
    %168 = vmatprep.subr.mxu0 0.0
    %169 = vmatpush1.msra.mxu0 %v42
    %170 = vmatprep.subr.mxu0 0.0
    %171 = vmatpush1.msra.mxu0 %v43
    %172 = vmatprep.subr.mxu0 0.0
    %173 = vmatpush1.msra.mxu0 %v44
    %174 = vmatprep.subr.mxu0 0.0
    %175 = vmatpush1.msra.mxu0 %v45
    %176 = vmatprep.subr.mxu0 0.0
    %177 = vmatpush1.msra.mxu0 %v46
    %178 = vmatprep.subr.mxu0 0.0
    %179 = vmatpush1.msra.mxu0 %v47
    %180 = vmatprep.subr.mxu0 0.0
    %181 = vmatpush1.msra.mxu0 %v48
    %182 = vmatprep.subr.mxu0 0.0
    %183 = vmatpush1.msra.mxu0 %v49
    %184 = vmatprep.subr.mxu0 0.0
    %185 = vmatpush1.msra.mxu0 %v50
    %186 = vmatprep.subr.mxu0 0.0
    %187 = vmatpush1.msra.mxu0 %v51
    %188 = vmatprep.subr.mxu0 0.0
    %189 = vmatpush1.msra.mxu0 %v52
    %190 = vmatprep.subr.mxu0 0.0
    %191 = vmatpush1.msra.mxu0 %v53
    %192 = vmatprep.subr.mxu0 0.0
    %193 = vmatpush1.msra.mxu0 %v54
    %194 = vmatprep.subr.mxu0 0.0
    %195 = vmatpush1.msra.mxu0 %v55
    %196 = vmatprep.subr.mxu0 0.0
    %197 = vmatpush1.msra.mxu0 %v56
    %198 = vmatprep.mubr.f32.mxu0 %v19
    %199 = vmatmul.mubr.f32.gmra.mrb[0].mxu0 %v18
    %v200 = vpop.f32.mrb[0].mxu0
    %v201 = vadd.f32 %v128, %v200
    %v202 = vpop.f32.mrb[0].mxu0
    %203 = vdwg.mxu0
    %204 = vmatprep.subr.mxu0 0.0
    %205 = vmatpush1.msra.mxu0 %v57
    %206 = vmatprep.subr.mxu0 0.0
    %207 = vmatpush1.msra.mxu0 %v58
    %208 = vmatprep.subr.mxu0 0.0
    %209 = vmatpush1.msra.mxu0 %v59
    %210 = vmatprep.subr.mxu0 0.0
    %211 = vmatpush1.msra.mxu0 %v60
    %212 = vmatprep.subr.mxu0 0.0
    %213 = vmatpush1.msra.mxu0 %v61
    %214 = vmatprep.subr.mxu0 0.0
    %215 = vmatpush1.msra.mxu0 %v62
    %216 = vmatprep.subr.mxu0 0.0
    %217 = vmatpush1.msra.mxu0 %v63
    %218 = vmatprep.subr.mxu0 0.0
    %219 = vmatpush1.msra.mxu0 %v64
    %220 = vmatprep.subr.mxu0 0.0
    %221 = vmatpush1.msra.mxu0 %v65
    %222 = vmatprep.subr.mxu0 0.0
    %223 = vmatpush1.msra.mxu0 %v66
    %224 = vmatprep.subr.mxu0 0.0
    %225 = vmatpush1.msra.mxu0 %v67
    %226 = vmatprep.subr.mxu0 0.0
    %227 = vmatpush1.msra.mxu0 %v68
    %228 = vmatprep.subr.mxu0 0.0
    %229 = vmatpush1.msra.mxu0 %v69
    %230 = vmatprep.subr.mxu0 0.0
    %231 = vmatpush1.msra.mxu0 %v70
    %232 = vmatprep.subr.mxu0 0.0
    %233 = vmatpush1.msra.mxu0 %v71
    %234 = vmatprep.subr.mxu0 0.0
    %235 = vmatpush1.msra.mxu0 %v72
    %236 = vmatprep.subr.mxu0 0.0
    %237 = vmatpush1.msra.mxu0 %v73
    %238 = vmatprep.subr.mxu0 0.0
    %239 = vmatpush1.msra.mxu0 %v74
    %240 = vmatprep.subr.mxu0 0.0
    %241 = vmatpush1.msra.mxu0 %v75
    %242 = vmatprep.subr.mxu0 0.0
    %243 = vmatpush1.msra.mxu0 %v76
    %244 = vmatprep.subr.mxu0 0.0
    %245 = vmatpush1.msra.mxu0 %v77
    %246 = vmatprep.subr.mxu0 0.0
    %247 = vmatpush1.msra.mxu0 %v78
    %248 = vmatprep.subr.mxu0 0.0
    %249 = vmatpush1.msra.mxu0 %v79
    %250 = vmatprep.subr.mxu0 0.0
    %251 = vmatpush1.msra.mxu0 %v80
    %252 = vmatprep.subr.mxu0 0.0
    %253 = vmatpush1.msra.mxu0 %v81
    %254 = vmatprep.subr.mxu0 0.0
    %255 = vmatpush1.msra.mxu0 %v82
    %256 = vmatprep.subr.mxu0 0.0
    %257 = vmatpush1.msra.mxu0 %v83
    %258 = vmatprep.subr.mxu0 0.0
    %259 = vmatpush1.msra.mxu0 %v84
    %260 = vmatprep.subr.mxu0 0.0
    %261 = vmatpush1.msra.mxu0 %v85
    %262 = vmatprep.subr.mxu0 0.0
    %263 = vmatpush1.msra.mxu0 %v86
    %264 = vmatprep.subr.mxu0 0.0
    %265 = vmatpush1.msra.mxu0 %v87
    %266 = vmatprep.subr.mxu0 0.0
    %267 = vmatpush1.msra.mxu0 %v88
    %268 = vmatprep.mubr.f32.mxu0 %v21
    %269 = vmatmul.mubr.f32.gmra.mrb[0].mxu0 %v20
    %v270 = vpop.f32.mrb[0].mxu0
    %v271 = vadd.f32 %v201, %v270
    %v272 = vpop.f32.mrb[0].mxu0
    %273 = vdwg.mxu0
    %274 = vmatprep.subr.mxu0 0.0
    %275 = vmatpush1.msra.mxu0 %v89
    %276 = vmatprep.subr.mxu0 0.0
    %277 = vmatpush1.msra.mxu0 %v90
    %278 = vmatprep.subr.mxu0 0.0
    %279 = vmatpush1.msra.mxu0 %v91
    %280 = vmatprep.subr.mxu0 0.0
    %281 = vmatpush1.msra.mxu0 %v92
    %282 = vmatprep.subr.mxu0 0.0
    %283 = vmatpush1.msra.mxu0 %v93
    %284 = vmatprep.subr.mxu0 0.0
    %285 = vmatpush1.msra.mxu0 %v94
    %286 = vmatprep.subr.mxu0 0.0
    %287 = vmatpush1.msra.mxu0 %v95
    %288 = vmatprep.subr.mxu0 0.0
    %289 = vmatpush1.msra.mxu0 %v96
    %290 = vmatprep.subr.mxu0 0.0
    %291 = vmatpush1.msra.mxu0 %v97
    %292 = vmatprep.subr.mxu0 0.0
    %293 = vmatpush1.msra.mxu0 %v98
    %294 = vmatprep.subr.mxu0 0.0
    %295 = vmatpush1.msra.mxu0 %v99
    %296 = vmatprep.subr.mxu0 0.0
    %297 = vmatpush1.msra.mxu0 %v100
    %298 = vmatprep.subr.mxu0 0.0
    %299 = vmatpush1.msra.mxu0 %v101
    %300 = vmatprep.subr.mxu0 0.0
    %301 = vmatpush1.msra.mxu0 %v102
    %302 = vmatprep.subr.mxu0 0.0
    %303 = vmatpush1.msra.mxu0 %v103
    %304 = vmatprep.subr.mxu0 0.0
    %305 = vmatpush1.msra.mxu0 %v104
    %306 = vmatprep.subr.mxu0 0.0
    %307 = vmatpush1.msra.mxu0 %v105
    %308 = vmatprep.subr.mxu0 0.0
    %309 = vmatpush1.msra.mxu0 %v106
    %310 = vmatprep.subr.mxu0 0.0
    %311 = vmatpush1.msra.mxu0 %v107
    %312 = vmatprep.subr.mxu0 0.0
    %313 = vmatpush1.msra.mxu0 %v108
    %314 = vmatprep.subr.mxu0 0.0
    %315 = vmatpush1.msra.mxu0 %v109
    %316 = vmatprep.subr.mxu0 0.0
    %317 = vmatpush1.msra.mxu0 %v110
    %318 = vmatprep.subr.mxu0 0.0
    %319 = vmatpush1.msra.mxu0 %v111
    %320 = vmatprep.subr.mxu0 0.0
    %321 = vmatpush1.msra.mxu0 %v112
    %322 = vmatprep.subr.mxu0 0.0
    %323 = vmatpush1.msra.mxu0 %v113
    %324 = vmatprep.subr.mxu0 0.0
    %325 = vmatpush1.msra.mxu0 %v114
    %326 = vmatprep.subr.mxu0 0.0
    %327 = vmatpush1.msra.mxu0 %v115
    %328 = vmatprep.subr.mxu0 0.0
    %329 = vmatpush1.msra.mxu0 %v116
    %330 = vmatprep.subr.mxu0 0.0
    %331 = vmatpush1.msra.mxu0 %v117
    %332 = vmatprep.subr.mxu0 0.0
    %333 = vmatpush1.msra.mxu0 %v118
    %334 = vmatprep.subr.mxu0 0.0
    %335 = vmatpush1.msra.mxu0 %v119
    %336 = vmatprep.subr.mxu0 0.0
    %337 = vmatpush1.msra.mxu0 %v120
    %338 = vmatprep.mubr.f32.mxu0 %v23
    %339 = vmatmul.mubr.f32.gmra.mrb[0].mxu0 %v22
    %v340 = vpop.f32.mrb[0].mxu0
    %v341 = vadd.f32 %v271, %v340
    %v342 = vpop.f32.mrb[0].mxu0
    %343 = vdwg.mxu0
    %344 = vmatprep.subr.mxu0 0.0
    %345 = vmatpush1.msra.mxu0 %v121
    %346 = vmatprep.subr.mxu0 0.0
    %347 = vmatpush1.msra.mxu0 %v122
    %348 = vmatprep.subr.mxu0 0.0
    %349 = vmatpush1.msra.mxu0 0.0
    %350 = vmatprep.subr.mxu0 0.0
    %351 = vmatpush1.msra.mxu0 0.0
    %352 = vmatprep.subr.mxu0 0.0
    %353 = vmatpush1.msra.mxu0 0.0
    %354 = vmatprep.subr.mxu0 0.0
    %355 = vmatpush1.msra.mxu0 0.0
    %356 = vmatprep.subr.mxu0 0.0
    %357 = vmatpush1.msra.mxu0 0.0
    %358 = vmatprep.subr.mxu0 0.0
    %359 = vmatpush1.msra.mxu0 0.0
    %360 = vmatprep.subr.mxu0 0.0
    %361 = vmatpush1.msra.mxu0 0.0
    %362 = vmatprep.subr.mxu0 0.0
    %363 = vmatpush1.msra.mxu0 0.0
    %364 = vmatprep.subr.mxu0 0.0
    %365 = vmatpush1.msra.mxu0 0.0
    %366 = vmatprep.subr.mxu0 0.0
    %367 = vmatpush1.msra.mxu0 0.0
    %368 = vmatprep.subr.mxu0 0.0
    %369 = vmatpush1.msra.mxu0 0.0
    %370 = vmatprep.subr.mxu0 0.0
    %371 = vmatpush1.msra.mxu0 0.0
    %372 = vmatprep.subr.mxu0 0.0
    %373 = vmatpush1.msra.mxu0 0.0
    %374 = vmatprep.subr.mxu0 0.0
    %375 = vmatpush1.msra.mxu0 0.0
    %376 = vmatprep.subr.mxu0 0.0
    %377 = vmatpush1.msra.mxu0 0.0
    %378 = vmatprep.subr.mxu0 0.0
    %379 = vmatpush1.msra.mxu0 0.0
    %380 = vmatprep.subr.mxu0 0.0
    %381 = vmatpush1.msra.mxu0 0.0
    %382 = vmatprep.subr.mxu0 0.0
    %383 = vmatpush1.msra.mxu0 0.0
    %384 = vmatprep.subr.mxu0 0.0
    %385 = vmatpush1.msra.mxu0 0.0
    %386 = vmatprep.subr.mxu0 0.0
    %387 = vmatpush1.msra.mxu0 0.0
    %388 = vmatprep.subr.mxu0 0.0
    %389 = vmatpush1.msra.mxu0 0.0
    %390 = vmatprep.subr.mxu0 0.0
    %391 = vmatpush1.msra.mxu0 0.0
    %392 = vmatprep.subr.mxu0 0.0
    %393 = vmatpush1.msra.mxu0 0.0
    %394 = vmatprep.subr.mxu0 0.0
    %395 = vmatpush1.msra.mxu0 0.0
    %396 = vmatprep.subr.mxu0 0.0
    %397 = vmatpush1.msra.mxu0 0.0
    %398 = vmatprep.subr.mxu0 0.0
    %399 = vmatpush1.msra.mxu0 0.0
    %400 = vmatprep.subr.mxu0 0.0
    %401 = vmatpush1.msra.mxu0 0.0
    %402 = vmatprep.subr.mxu0 0.0
    %403 = vmatpush1.msra.mxu0 0.0
    %404 = vmatprep.subr.mxu0 0.0
    %405 = vmatpush1.msra.mxu0 0.0
    %406 = vmatprep.subr.mxu0 0.0
    %407 = vmatpush1.msra.mxu0 0.0
    %408 = vmatprep.mubr.f32.mxu0 0.0
    %409 = vmatmul.mubr.f32.gmra.mrb[0].mxu0 %v132
    %v410 = vpop.f32.mrb[0].mxu0
    %v411 = vadd.f32 %v341, %v410
    %v412 = vpop.f32.mrb[0].mxu0
    %413 = vdwg.mxu0
    %414 = vmax.xlane.f32.xlu0 %v411
    %v415 = vpop.xlane.xlu0 %414
    %v416 = vsub.f32 %v411, %v415
    %v417 = vmul.f32 %v416, 1.442695
    %v418 = vpow.pop %v417
    %419 = vadd.xlane.f32.xlu0 %v418
    %v420 = vpop.xlane.xlu0 %419
    %v421 = vrcp.pop %v420
    %v422 = vmul.f32 %v418, %v421
    %423 = vst [vmem:[#allocation2] sm:$0xff] %v411
    %424 = vst [vmem:[#allocation4] sm:$0xff] %v422
    // Predicated region
    $region14: #{softmax_regression_forward.1} parent=1 // pred_check
      _
    $region15: #{softmax_regression_forward.1} parent=1 // pred_check_branch
      %426 = sbr.rel (0) target = $region17
    $region16: #{softmax_regression_forward.1} parent=1 // pred_region
      %s428 = ssub.s32 128, 128
      %429 = vsyncadd [#allocation3], %s428
      %s431 = sshll.u32 [#allocation2], 4
      %s432 = int_to_ptr.vmem [resolvable:$true] %s431
      %434 = dma.vmem_to_hbm [thread:$0]  %s432, 128, %s3, [#allocation3]
    $region17: #{softmax_regression_forward.1} parent=1 // pred_fallthru
      _
    // Predicated region
    $region18: #{softmax_regression_forward.1} parent=1 // pred_check
      _
    $region19: #{softmax_regression_forward.1} parent=1 // pred_check_branch
      %436 = sbr.rel (0) target = $region21
    $region20: #{softmax_regression_forward.1} parent=1 // pred_region
      %s438 = ssub.s32 128, 128
      %439 = vsyncadd [#allocation5], %s438
      %s441 = sshll.u32 [#allocation4], 4
      %s442 = int_to_ptr.vmem [resolvable:$true] %s441
      %444 = dma.vmem_to_hbm [thread:$0]  %s442, 128, %s4, [#allocation5]
    $region21: #{softmax_regression_forward.1} parent=1 // pred_fallthru
      _
    // Predicated region
    $region22: #{softmax_regression_forward.1} parent=1 // pred_check
      _
    $region23: #{softmax_regression_forward.1} parent=1 // pred_check_branch
      %446 = sbr.rel (0) target = $region25
    $region24: #{softmax_regression_forward.1} parent=1 // pred_region
      %447 = dma.done [#allocation3], 128
    $region25: #{softmax_regression_forward.1} parent=1 // pred_fallthru
      _
    // Predicated region
    $region26: #{softmax_regression_forward.1} parent=1 // pred_check
      _
    $region27: #{softmax_regression_forward.1} parent=1 // pred_check_branch
      %449 = sbr.rel (0) target = $region29
    $region28: #{softmax_regression_forward.1} parent=1 // pred_region
      %450 = dma.done [#allocation5], 128
    $region29: #{softmax_regression_forward.1} parent=1 // pred_fallthru
      _
    %451 = vsyncpa [#allocation3], 1
    %452 = vsyncpa [#allocation5], 1

</llo_original>
